<compile_context>
chip_gen: v7x
topology: tpu7x:2x2x1
jax: 0.10.0
libtpu: 0.0.40
codegen_flags: <defaults>
</compile_context>

<pallas_src>
import functools
import math

import jax
import jax.numpy as jnp
from jax.experimental import pallas as pl
from jax.experimental.pallas import tpu as pltpu


def _round_up(x: int, m: int) -> int:
    return (x + m - 1) // m * m


def _default_tiles(m: int, k: int, n: int):
    """Shape-adaptive tile sizes (bf16: sublane granule 16, lane granule 128)."""
    tm = min(256, _round_up(m, 16))     # small-M (decode): tm == padded M, grid-M == 1
    tn = min(512, _round_up(n, 128))    # multiples of 128; >=256 fills v6e/v7x MXU
    tk = min(1024, _round_up(k, 128))   # large K tiles amortize per-step overhead
    return tm, tn, tk


def _linear_kernel(x_ref, w_ref, o_ref, acc_ref):
    """One (tm, tn) output tile, reducing over the K grid axis (no bias)."""
    k = pl.program_id(2)

    @pl.when(k == 0)
    def _():
        acc_ref[...] = jnp.zeros_like(acc_ref)

    acc_ref[...] += jnp.dot(
        x_ref[...], w_ref[...], preferred_element_type=jnp.float32
    )

    @pl.when(k == pl.num_programs(2) - 1)
    def _():
        o_ref[...] = acc_ref[...].astype(o_ref.dtype)


def _linear_bias_kernel(x_ref, w_ref, b_ref, o_ref, acc_ref):
    """Same as _linear_kernel, with bias fused into the fp32 epilogue."""
    k = pl.program_id(2)

    @pl.when(k == 0)
    def _():
        acc_ref[...] = jnp.zeros_like(acc_ref)

    acc_ref[...] += jnp.dot(
        x_ref[...], w_ref[...], preferred_element_type=jnp.float32
    )

    @pl.when(k == pl.num_programs(2) - 1)
    def _():
        o_ref[...] = (acc_ref[...] + b_ref[...].astype(jnp.float32)).astype(
            o_ref.dtype
        )


@jax.jit
def linear_pallas(x, weight_t, bias=None):
    """y = x @ weight_t (+ bias), matching F.linear(x, weight, bias).

    x:        (..., in_features)           any float dtype (cast to bf16)
    weight_t: (in_features, out_features)  pre-transposed weight, bf16
    bias:     optional (out_features,)
    """
    k_dim, n_dim = weight_t.shape
    leading = x.shape[:-1]
    m = int(math.prod(leading)) if leading else 1

    x2d = x.reshape(m, k_dim).astype(jnp.bfloat16)
    wt = weight_t.astype(jnp.bfloat16)

    tm, tn, tk = _default_tiles(m, k_dim, n_dim)
    mp = _round_up(m, tm)
    kp = _round_up(k_dim, tk)
    np_ = _round_up(n_dim, tn)

    # Pad once in the wrapper (zero-padding K is exact for the matmul).
    if mp != m or kp != k_dim:
        x2d = jnp.pad(x2d, ((0, mp - m), (0, kp - k_dim)))
    if kp != k_dim or np_ != n_dim:
        wt = jnp.pad(wt, ((0, kp - k_dim), (0, np_ - n_dim)))

    grid = (mp // tm, np_ // tn, kp // tk)

    in_specs = [
        pl.BlockSpec((tm, tk), lambda i, j, k: (i, k)),
        pl.BlockSpec((tk, tn), lambda i, j, k: (k, j)),
    ]
    args = [x2d, wt]
    if bias is not None:
        b2d = bias.astype(jnp.bfloat16).reshape(1, n_dim)
        if np_ != n_dim:
            b2d = jnp.pad(b2d, ((0, 0), (0, np_ - n_dim)))
        in_specs.append(pl.BlockSpec((1, tn), lambda i, j, k: (0, j)))
        args.append(b2d)
        kernel = _linear_bias_kernel
    else:
        kernel = _linear_kernel

    # VMEM budget: double-buffered bf16 inputs/outputs + fp32 accumulator.
    vmem_bytes = (
        2 * (tm * tk + tk * tn) * 2   # x/w tiles, 2 bufs each, bf16
        + 2 * tm * tn * 2             # output tile, 2 bufs, bf16
        + tm * tn * 4                 # fp32 accumulator scratch
        + 2 * tn * 2                  # bias tile
    )
    # Keep <= 48 MiB so it is valid on v7x (64 MiB physical) and v5e/v6e.
    vmem_limit = int(min(max(2 * vmem_bytes + (8 << 20), 32 << 20), 48 << 20))

    y2d = pl.pallas_call(
        kernel,
        out_shape=jax.ShapeDtypeStruct((mp, np_), jnp.bfloat16),
        grid_spec=pltpu.PrefetchScalarGridSpec(
            num_scalar_prefetch=0,
            grid=grid,
            in_specs=in_specs,
            out_specs=pl.BlockSpec((tm, tn), lambda i, j, k: (i, j)),
            scratch_shapes=[pltpu.VMEM((tm, tn), jnp.float32)],
        ),
        compiler_params=pltpu.CompilerParams(
            dimension_semantics=("parallel", "parallel", "arbitrary"),
            vmem_limit_bytes=vmem_limit,
        ),
    )(*args)

    if mp != m or np_ != n_dim:
        y2d = y2d[:m, :n_dim]
    return y2d.reshape(*leading, n_dim)


class Linear:
    """Mirror of the PyTorch module (bias=False default, bf16 dtype)."""

    dtype = jnp.bfloat16

    def __init__(self, in_features: int, out_features: int, bias: bool = False,
                 *, key=None):
        self.in_features = in_features
        self.out_features = out_features
        if key is None:
            key = jax.random.PRNGKey(0)
        wkey, bkey = jax.random.split(key)
        # Deterministic synthetic init (torch.empty is uninitialized; we use
        # a standard fan-in scaled normal so values are reproducible).
        std = 1.0 / math.sqrt(in_features)
        self.weight = (jax.random.normal(wkey, (out_features, in_features),
                                         jnp.float32) * std).astype(self.dtype)
        # Transpose ONCE at init so the kernel sees a lane-dense (K, N) weight
        # and no per-call transpose copy is needed.
        self.weight_t = jnp.asarray(self.weight.T)
        if bias:
            self.bias = (jax.random.normal(bkey, (out_features,), jnp.float32)
                         * std).astype(self.dtype)
        else:
            self.bias = None

    def __call__(self, x):
        return linear_pallas(x, self.weight_t, self.bias)


def _reference(x, weight, bias):
    y = jnp.dot(x.astype(jnp.float32).reshape(-1, weight.shape[1]),
                weight.astype(jnp.float32).T)
    if bias is not None:
        y = y + bias.astype(jnp.float32)[None, :]
    return y.reshape(*x.shape[:-1], weight.shape[0]).astype(jnp.bfloat16)


if __name__ == "__main__":
    key = jax.random.PRNGKey(0)
    k_x1, k_m1, k_x2, k_m2 = jax.random.split(key, 4)

    # Test 1: aligned shapes, no bias (module default).
    batch, seq, in_features, out_features = 2, 8, 128, 256
    x1 = jax.random.normal(k_x1, (batch, seq, in_features),
                           jnp.float32).astype(jnp.bfloat16)
    mod1 = Linear(in_features, out_features, bias=False, key=k_m1)
    y1 = mod1(x1)
    jax.block_until_ready(y1)
    assert y1.shape == (batch, seq, out_features)
    y1_ref = _reference(x1, mod1.weight, None)
    assert jnp.allclose(y1.astype(jnp.float32), y1_ref.astype(jnp.float32),
                        atol=1e-1, rtol=1e-1)

    # Test 2: unaligned shapes + fused bias (exercises padding path).
    batch2, seq2, in2, out2 = 2, 7, 96, 200
    x2 = jax.random.normal(k_x2, (batch2, seq2, in2),
                           jnp.float32).astype(jnp.bfloat16)
    mod2 = Linear(in2, out2, bias=True, key=k_m2)
    y2 = mod2(x2)
    jax.block_until_ready(y2)
    assert y2.shape == (batch2, seq2, out2)
    y2_ref = _reference(x2, mod2.weight, mod2.bias)
    assert jnp.allclose(y2.astype(jnp.float32), y2_ref.astype(jnp.float32),
                        atol=1e-1, rtol=1e-1)

    print("KERNEL_OK")
</pallas_src>

<mosaic_0001>
module attributes {stable_mosaic.version = 11 : i64} {
  func.func @_linear_kernel(%arg0: i32, %arg1: i32, %arg2: i32, %arg3: memref<16x128xbf16, #tpu.memory_space<vmem>>, %arg4: memref<128x256xbf16, #tpu.memory_space<vmem>>, %arg5: memref<16x256xbf16, #tpu.memory_space<vmem>>, %arg6: memref<16x256xf32, #tpu.memory_space<vmem>>) attributes {dimension_semantics = [#tpu.dimension_semantics<parallel>, #tpu.dimension_semantics<parallel>, #tpu.dimension_semantics<arbitrary>], iteration_bounds = array<i64: 1, 1, 1>, scalar_prefetch = 0 : i64, scratch_operands = 1 : i64, tpu.core_type = #tpu.core_type<tc>, window_params = [{transform_indices = @transform_0, window_bounds = array<i64: 16, 128>}, {transform_indices = @transform_1, window_bounds = array<i64: 128, 256>}, {transform_indices = @transform_2, window_bounds = array<i64: 16, 256>}]} {
    %c0_i32 = arith.constant 0 : i32
    %0 = arith.cmpi eq, %arg2, %c0_i32 : i32
    %1 = arith.extui %0 : i1 to i32
    %c0_i32_0 = arith.constant 0 : i32
    %2 = arith.cmpi ne, %1, %c0_i32_0 : i32
    scf.if %2 {
      %cst_10 = arith.constant 0.000000e+00 : f32
      %12 = vector.broadcast %cst_10 : f32 to vector<16x256xf32>
      %c0_11 = arith.constant 0 : index
      %c0_12 = arith.constant 0 : index
      %13 = vector.load %arg6[%c0_11, %c0_12] : memref<16x256xf32, #tpu.memory_space<vmem>>, vector<16x256xf32>
      tpu.vector_store %arg6[%c0_11, %c0_12], %12 {strides = array<i32>} : memref<16x256xf32, #tpu.memory_space<vmem>>, vector<16x256xf32>,
    } else {
    }
    %c0 = arith.constant 0 : index
    %c0_1 = arith.constant 0 : index
    %3 = vector.load %arg6[%c0, %c0_1] : memref<16x256xf32, #tpu.memory_space<vmem>>, vector<16x256xf32>
    %c0_2 = arith.constant 0 : index
    %c0_3 = arith.constant 0 : index
    %4 = vector.load %arg3[%c0_2, %c0_3] : memref<16x128xbf16, #tpu.memory_space<vmem>>, vector<16x128xbf16>
    %c0_4 = arith.constant 0 : index
    %c0_5 = arith.constant 0 : index
    %5 = vector.load %arg4[%c0_4, %c0_5] : memref<128x256xbf16, #tpu.memory_space<vmem>>, vector<128x256xbf16>
    %cst = arith.constant dense<0.000000e+00> : vector<16x256xf32>
    %6 = tpu.matmul %4, %5, %cst {dimension_numbers = #tpu.dot_dimension_numbers<[1], [0], [0], [1], [0, 0, 1, 1], [], []>} : vector<16x128xbf16>, vector<128x256xbf16>, vector<16x256xf32> -> vector<16x256xf32>
    %7 = arith.addf %3, %6 : vector<16x256xf32>
    %c0_6 = arith.constant 0 : index
    %c0_7 = arith.constant 0 : index
    %8 = vector.load %arg6[%c0_6, %c0_7] : memref<16x256xf32, #tpu.memory_space<vmem>>, vector<16x256xf32>
    tpu.vector_store %arg6[%c0_6, %c0_7], %7 {strides = array<i32>} : memref<16x256xf32, #tpu.memory_space<vmem>>, vector<16x256xf32>,
    %c0_i32_8 = arith.constant 0 : i32
    %9 = arith.cmpi eq, %arg2, %c0_i32_8 : i32
    %10 = arith.extui %9 : i1 to i32
    %c0_i32_9 = arith.constant 0 : i32
    %11 = arith.cmpi ne, %10, %c0_i32_9 : i32
    scf.if %11 {
      %c0_10 = arith.constant 0 : index
      %c0_11 = arith.constant 0 : index
      %12 = vector.load %arg6[%c0_10, %c0_11] : memref<16x256xf32, #tpu.memory_space<vmem>>, vector<16x256xf32>
      %13 = arith.truncf %12 : vector<16x256xf32> to vector<16x256xbf16>
      %c0_12 = arith.constant 0 : index
      %c0_13 = arith.constant 0 : index
      %14 = vector.load %arg5[%c0_12, %c0_13] : memref<16x256xbf16, #tpu.memory_space<vmem>>, vector<16x256xbf16>
      tpu.vector_store %arg5[%c0_12, %c0_13], %13 {strides = array<i32>} : memref<16x256xbf16, #tpu.memory_space<vmem>>, vector<16x256xbf16>,
    } else {
    }
    return
  }
  func.func @transform_0(%arg0: i32, %arg1: i32, %arg2: i32) -> (i32, i32) {
    %c0_i32 = arith.constant 0 : i32
    return %arg0, %arg2 : i32, i32
  }
  func.func @transform_1(%arg0: i32, %arg1: i32, %arg2: i32) -> (i32, i32) {
    %c0_i32 = arith.constant 0 : i32
    return %arg2, %arg1 : i32, i32
  }
  func.func @transform_2(%arg0: i32, %arg1: i32, %arg2: i32) -> (i32, i32) {
    %c0_i32 = arith.constant 0 : i32
    return %arg0, %arg1 : i32, i32
  }
}

</mosaic_0001>

<llo_original>
// kernel: linear_pallas.1
$region0: #{linear_pallas.1}
  #allocation0 [shape = 'u32[]', space=smem, size = 0x4, offset = 0x4, fixed_abs, tag = 'smem constant byte address 0x4 - core index']
  #allocation1 [shape = 'u32[144,128]{1,0:T(1,128)}', space=vmem, size = 0x12000, scoped, tag = 'internal scratch']
  #allocation2 [shape = 'f32[16,256]{1,0:T(8,128)}', space=vmem, size = 0x4000, scoped, tag = 'scratch operand']
  %s0 = inlined_call_operand.hbm [shape: bf16[16,128], index: 0, kind: input, shape index: {}]
  %s1 = inlined_call_operand.hbm [shape: bf16[128,256], index: 1, kind: input, shape index: {}]
  %s2 = inlined_call_operand.hbm [shape: bf16[16,256], index: 2, kind: output, shape index: {}]
  %s3 = sld [smem:[#allocation0]]
  $region34: #{linear_pallas.1} parent=0
    _
  %s5 = ssub.s32 1, %s3
  %s6 = scalar_select 0, %s5, %s3
  $region1: #{linear_pallas.1} parent=0
    #allocation3 [shape = 'u8[4096]{0}', space=vmem, size = 0x1000, scoped, tag = 'input window, operand 0, single buffered']
    #allocation4 [shape = 's32[1]{0}', space=sflag, size = 0x4, scoped, tag = 'scoped memory for linear_pallas.1']
    #allocation5 [shape = 's32[1]{0}', space=sflag, size = 0x4, scoped, tag = 'scoped memory for linear_pallas.1']
    #allocation6 [shape = 'u8[65536]{0}', space=vmem, size = 0x10000, scoped, tag = 'input window, operand 1, single buffered']
    #allocation7 [shape = 's32[1]{0}', space=sflag, size = 0x4, scoped, tag = 'scoped memory for linear_pallas.1']
    #allocation8 [shape = 'u8[8192]{0}', space=vmem, size = 0x2000, scoped, tag = 'output window, operand 0, single buffered']
    %7 = vsyncpa [#allocation4], 0
    %8 = vsyncpa [#allocation7], 0
    %9 = vsyncpa [#allocation5], 0
    // Predicated region
    $region2: #{linear_pallas.1} parent=1 // pred_check
      _
    $region3: #{linear_pallas.1} parent=1 // pred_check_branch
      %11 = sbr.rel (0) target = $region5
    $region4: #{linear_pallas.1} parent=1 // pred_region
      %s13 = ssub.s32 128, 128
      %14 = vsyncadd [#allocation4], %s13
      %s15 = sshll.u32 [#allocation3], 4
      %s16 = int_to_ptr.vmem [resolvable:$true] %s15
      %21 = dma.hbm_to_vmem [thread:$0]  %s0, 128, %s16, [#allocation4], 64, 64, 4
    $region5: #{linear_pallas.1} parent=1 // pred_fallthru
      _
    // Predicated region
    $region6: #{linear_pallas.1} parent=1 // pred_check
      _
    $region7: #{linear_pallas.1} parent=1 // pred_check_branch
      %23 = sbr.rel (0) target = $region9
    $region8: #{linear_pallas.1} parent=1 // pred_region
      %s25 = ssub.s32 2048, 2048
      %26 = vsyncadd [#allocation7], %s25
      %s27 = sshll.u32 [#allocation6], 4
      %s28 = int_to_ptr.vmem [resolvable:$true] %s27
      %33 = dma.hbm_to_vmem [thread:$0]  %s1, 2048, %s28, [#allocation7], 128, 128, 8
    $region9: #{linear_pallas.1} parent=1 // pred_fallthru
      _
    // Predicated region
    $region10: #{linear_pallas.1} parent=1 // pred_check
      _
    $region11: #{linear_pallas.1} parent=1 // pred_check_branch
      %35 = sbr.rel (0) target = $region13
    $region12: #{linear_pallas.1} parent=1 // pred_region
      %36 = dma.done [#allocation4], 128
    $region13: #{linear_pallas.1} parent=1 // pred_fallthru
      _
    // Predicated region
    $region14: #{linear_pallas.1} parent=1 // pred_check
      _
    $region15: #{linear_pallas.1} parent=1 // pred_check_branch
      %38 = sbr.rel (0) target = $region17
    $region16: #{linear_pallas.1} parent=1 // pred_region
      %39 = dma.done [#allocation7], 2048
    $region17: #{linear_pallas.1} parent=1 // pred_fallthru
      _
    %p41 = scmp.eq.s32.totalorder 0, 0
    // Predicated region
    $region18: #{linear_pallas.1} parent=1 // pred_check
      %p42 = pneg %p41
    $region19: #{linear_pallas.1} parent=1 // pred_check_branch
      %44 = sbr.rel (%p42) target = $region21
    $region20: #{linear_pallas.1} parent=1 // pred_region
      %45 = vst [vmem:[#allocation2] sm:$0xff] 0.0
      %46 = vst [vmem:[#allocation2 + $0x8] sm:$0xff] 0.0
      %47 = vst [vmem:[#allocation2 + $0x10] sm:$0xff] 0.0
      %48 = vst [vmem:[#allocation2 + $0x18] sm:$0xff] 0.0
    $region21: #{linear_pallas.1} parent=1 // pred_fallthru
      _
    %v49 = vld [vmem:[#allocation2] sm:$0xff]
    %v50 = vld [vmem:[#allocation2 + $0x8] sm:$0xff]
    %v51 = vld [vmem:[#allocation2 + $0x10] sm:$0xff]
    %v52 = vld [vmem:[#allocation2 + $0x18] sm:$0xff]
    %v53 = vld [vmem:[#allocation3] sm:$0xf]
    %v54 = vld [vmem:[#allocation3 + $0x4] sm:$0xf]
    %v55 = vld [vmem:[#allocation6] sm:$0xff]
    %v56 = vld [vmem:[#allocation6 + $0x8] sm:$0xff]
    %v57 = vld [vmem:[#allocation6 + $0x10] sm:$0xff]
    %v58 = vld [vmem:[#allocation6 + $0x18] sm:$0xff]
    %v59 = vld [vmem:[#allocation6 + $0x20] sm:$0xff]
    %v60 = vld [vmem:[#allocation6 + $0x28] sm:$0xff]
    %v61 = vld [vmem:[#allocation6 + $0x30] sm:$0xff]
    %v62 = vld [vmem:[#allocation6 + $0x38] sm:$0xff]
    %v63 = vld [vmem:[#allocation6 + $0x40] sm:$0xff]
    %v64 = vld [vmem:[#allocation6 + $0x48] sm:$0xff]
    %v65 = vld [vmem:[#allocation6 + $0x50] sm:$0xff]
    %v66 = vld [vmem:[#allocation6 + $0x58] sm:$0xff]
    %v67 = vld [vmem:[#allocation6 + $0x60] sm:$0xff]
    %v68 = vld [vmem:[#allocation6 + $0x68] sm:$0xff]
    %v69 = vld [vmem:[#allocation6 + $0x70] sm:$0xff]
    %v70 = vld [vmem:[#allocation6 + $0x78] sm:$0xff]
    %v73 = vunpack.c.l.b16 %v53
    %v74 = vunpack.c.l.b16 %v54
    %v75 = vpack.c.b16 %v74, %v73
    %v93 = vunpack.c.l.b16 %v55
    %v94 = vunpack.c.h.b16 %v55
    %v95 = vunpack.c.l.b16 %v56
    %v96 = vunpack.c.h.b16 %v56
    %v97 = vunpack.c.l.b16 %v57
    %v98 = vunpack.c.h.b16 %v57
    %v99 = vunpack.c.l.b16 %v58
    %v100 = vunpack.c.h.b16 %v58
    %v101 = vunpack.c.l.b16 %v59
    %v102 = vunpack.c.h.b16 %v59
    %v103 = vunpack.c.l.b16 %v60
    %v104 = vunpack.c.h.b16 %v60
    %v105 = vunpack.c.l.b16 %v61
    %v106 = vunpack.c.h.b16 %v61
    %v107 = vunpack.c.l.b16 %v62
    %v108 = vunpack.c.h.b16 %v62
    %v109 = vunpack.c.l.b16 %v63
    %v110 = vunpack.c.h.b16 %v63
    %v111 = vunpack.c.l.b16 %v64
    %v112 = vunpack.c.h.b16 %v64
    %v113 = vunpack.c.l.b16 %v65
    %v114 = vunpack.c.h.b16 %v65
    %v115 = vunpack.c.l.b16 %v66
    %v116 = vunpack.c.h.b16 %v66
    %v117 = vunpack.c.l.b16 %v67
    %v118 = vunpack.c.h.b16 %v67
    %v119 = vunpack.c.l.b16 %v68
    %v120 = vunpack.c.h.b16 %v68
    %v121 = vunpack.c.l.b16 %v69
    %v122 = vunpack.c.h.b16 %v69
    %v123 = vunpack.c.l.b16 %v70
    %v124 = vunpack.c.h.b16 %v70
    %v125 = vpack.c.b16 %v95, %v93
    %v126 = vpack.c.b16 %v96, %v94
    %v127 = vpack.c.b16 %v99, %v97
    %v128 = vpack.c.b16 %v100, %v98
    %v129 = vpack.c.b16 %v103, %v101
    %v130 = vpack.c.b16 %v104, %v102
    %v131 = vpack.c.b16 %v107, %v105
    %v132 = vpack.c.b16 %v108, %v106
    %v133 = vpack.c.b16 %v111, %v109
    %v134 = vpack.c.b16 %v112, %v110
    %v135 = vpack.c.b16 %v115, %v113
    %v136 = vpack.c.b16 %v116, %v114
    %v137 = vpack.c.b16 %v119, %v117
    %v138 = vpack.c.b16 %v120, %v118
    %v139 = vpack.c.b16 %v123, %v121
    %v140 = vpack.c.b16 %v124, %v122
    %157 = vmatprep.subr.bf16.mxu0 %v126
    %158 = vmatpush1.bf16.msra.mxu0 %v125
    %159 = vmatprep.subr.bf16.mxu0 %v128
    %160 = vmatpush1.bf16.msra.mxu0 %v127
    %161 = vmatprep.subr.bf16.mxu0 %v130
    %162 = vmatpush1.bf16.msra.mxu0 %v129
    %163 = vmatprep.subr.bf16.mxu0 %v132
    %164 = vmatpush1.bf16.msra.mxu0 %v131
    %165 = vmatprep.subr.bf16.mxu0 %v134
    %166 = vmatpush1.bf16.msra.mxu0 %v133
    %167 = vmatprep.subr.bf16.mxu0 %v136
    %168 = vmatpush1.bf16.msra.mxu0 %v135
    %169 = vmatprep.subr.bf16.mxu0 %v138
    %170 = vmatpush1.bf16.msra.mxu0 %v137
    %171 = vmatprep.subr.bf16.mxu0 %v140
    %172 = vmatpush1.bf16.msra.mxu0 %v139
    %173 = vmatprep.subr.bf16.mxu0 0
    %174 = vmatpush1.bf16.msra.mxu0 0
    %175 = vmatprep.subr.bf16.mxu0 0
    %176 = vmatpush1.bf16.msra.mxu0 0
    %177 = vmatprep.subr.bf16.mxu0 0
    %178 = vmatpush1.bf16.msra.mxu0 0
    %179 = vmatprep.subr.bf16.mxu0 0
    %180 = vmatpush1.bf16.msra.mxu0 0
    %181 = vmatprep.subr.bf16.mxu0 0
    %182 = vmatpush1.bf16.msra.mxu0 0
    %183 = vmatprep.subr.bf16.mxu0 0
    %184 = vmatpush1.bf16.msra.mxu0 0
    %185 = vmatprep.subr.bf16.mxu0 0
    %186 = vmatpush1.bf16.msra.mxu0 0
    %187 = vmatprep.subr.bf16.mxu0 0
    %188 = vmatpush1.bf16.msra.mxu0 0
    %189 = vmatprep.mubr.bf16.mxu0 0
    %190 = vmatmul.mubr.bf16.gmra.mrb[0].mxu0 %v75
    %v191 = vpop.f32.mrb[0].mxu0
    %v192 = vadd.f32 0.0, %v191
    %v193 = vpop.f32.mrb[0].mxu0
    %v194 = vadd.f32 0.0, %v193
    %v195 = vpop.f32.mrb[0].mxu0
    %v196 = vadd.f32 0.0, %v195
    %v197 = vpop.f32.mrb[0].mxu0
    %v198 = vadd.f32 0.0, %v197
    %199 = vdwg.mxu0
    %v200 = vadd.f32 %v49, %v192
    %v201 = vadd.f32 %v50, %v194
    %v202 = vadd.f32 %v51, %v196
    %v203 = vadd.f32 %v52, %v198
    %204 = vst [vmem:[#allocation2] sm:$0xff] %v200
    %205 = vst [vmem:[#allocation2 + $0x8] sm:$0xff] %v201
    %206 = vst [vmem:[#allocation2 + $0x10] sm:$0xff] %v202
    %207 = vst [vmem:[#allocation2 + $0x18] sm:$0xff] %v203
    // Predicated region
    $region22: #{linear_pallas.1} parent=1 // pred_check
      %p208 = pneg %p41
    $region23: #{linear_pallas.1} parent=1 // pred_check_branch
      %210 = sbr.rel (%p208) target = $region25
    $region24: #{linear_pallas.1} parent=1 // pred_region
      %v211 = vld [vmem:[#allocation2] sm:$0xff]
      %v212 = vld [vmem:[#allocation2 + $0x8] sm:$0xff]
      %v213 = vld [vmem:[#allocation2 + $0x10] sm:$0xff]
      %v214 = vld [vmem:[#allocation2 + $0x18] sm:$0xff]
      %v215 = vpack.c.bf16 %v213, %v211
      %v216 = vpack.c.bf16 %v214, %v212
      %v219 = vunpack.c.l.b16 %v215
      %v220 = vunpack.c.l.b16 %v216
      %v221 = vunpack.c.h.b16 %v215
      %v222 = vunpack.c.h.b16 %v216
      %v223 = vpack.c.b16 %v220, %v219
      %v224 = vpack.c.b16 %v222, %v221
      %227 = vst [vmem:[#allocation8] sm:$0xff] %v223
      %228 = vst [vmem:[#allocation8 + $0x8] sm:$0xff] %v224
    $region25: #{linear_pallas.1} parent=1 // pred_fallthru
      _
    // Predicated region
    $region26: #{linear_pallas.1} parent=1 // pred_check
      _
    $region27: #{linear_pallas.1} parent=1 // pred_check_branch
      %230 = sbr.rel (0) target = $region29
    $region28: #{linear_pallas.1} parent=1 // pred_region
      %s232 = ssub.s32 256, 256
      %233 = vsyncadd [#allocation5], %s232
      %s234 = sshll.u32 [#allocation8], 4
      %s235 = int_to_ptr.vmem [resolvable:$true] %s234
      %240 = dma.vmem_to_hbm [thread:$0]  %s235, 256, %s2, [#allocation5], 128, 128, 8
    $region29: #{linear_pallas.1} parent=1 // pred_fallthru
      _
    // Predicated region
    $region30: #{linear_pallas.1} parent=1 // pred_check
      _
    $region31: #{linear_pallas.1} parent=1 // pred_check_branch
      %242 = sbr.rel (0) target = $region33
    $region32: #{linear_pallas.1} parent=1 // pred_region
      %243 = dma.done [#allocation5], 256
    $region33: #{linear_pallas.1} parent=1 // pred_fallthru
      _
    %244 = vsyncpa [#allocation4], 1
    %245 = vsyncpa [#allocation7], 1
    %246 = vsyncpa [#allocation5], 1

</llo_original>
